<compile_context>
chip_gen: v7x
topology: tpu7x:2x2x1
jax: 0.10.0
libtpu: 0.0.40
codegen_flags: <defaults>
</compile_context>

<pallas_src>
import jax
import jax.numpy as jnp
from jax.experimental import pallas as pl
from jax.experimental.pallas import tpu as pltpu


# ----------------------------------------------------------------------------
# Kernel bodies
# ----------------------------------------------------------------------------
def _mapper_body(x_ref, w1_ref, b1_ref, w2_ref, b2_ref, out_ref):
    # y = tanh(x @ W1 + b1) @ W2 + b2
    # MXU inputs are bf16 with f32 accumulation; bias-add and tanh stay f32.
    # TODO(synk): intentional precision drop vs the all-f32 PyTorch head — x
    # and the hidden activation are rounded to bf16 before each MXU dot (the
    # reference below bakes in the identical rounding). Switch to f32 dots if
    # exact f32 parity with the torch module is ever required.
    x = x_ref[...].astype(jnp.bfloat16)
    h = jnp.dot(x, w1_ref[...], preferred_element_type=jnp.float32)   # MXU
    h = jnp.tanh(h + b1_ref[...])                                     # VPU/EUP
    y = jnp.dot(h.astype(jnp.bfloat16), w2_ref[...],
                preferred_element_type=jnp.float32)                   # MXU
    out_ref[...] = (y + b2_ref[...]).astype(out_ref.dtype)


def fused_heads_kernel(img_x_ref, aud_x_ref,
                       iw1_ref, ib1_ref, iw2_ref, ib2_ref,
                       aw1_ref, ab1_ref, aw2_ref, ab2_ref,
                       scale_ref,
                       img_out_ref, aud_out_ref, scale_out_ref):
    # Single grid-less body: both heads + the logit_scale scalar in one
    # pallas_call invocation, no grid steps, no shared-block writes.
    _mapper_body(img_x_ref, iw1_ref, ib1_ref, iw2_ref, ib2_ref, img_out_ref)
    _mapper_body(aud_x_ref, aw1_ref, ab1_ref, aw2_ref, ab2_ref, aud_out_ref)
    # logit_scale = clamp(exp(s), 0, 100)
    scale_out_ref[...] = jnp.clip(jnp.exp(scale_ref[...]), 0.0, 100.0)


def image_only_kernel(img_x_ref, iw1_ref, ib1_ref, iw2_ref, ib2_ref, scale_ref,
                      img_out_ref, scale_out_ref):
    # has_audio_mapper == False path: single mapper + logit_scale, one launch.
    _mapper_body(img_x_ref, iw1_ref, ib1_ref, iw2_ref, ib2_ref, img_out_ref)
    scale_out_ref[...] = jnp.clip(jnp.exp(scale_ref[...]), 0.0, 100.0)


# ----------------------------------------------------------------------------
# pallas_call wrappers
# ----------------------------------------------------------------------------
def _full(shape):
    """Full-extent block for a grid-less call (whole array VMEM-resident)."""
    zeros = (0,) * len(shape)
    return pl.BlockSpec(shape, lambda: zeros)


def fused_heads(params, image_emb, audio_emb):
    B, Din_i = image_emb.shape
    _, Din_a = audio_emb.shape
    H = params["img_w1"].shape[1]
    Dout = params["img_w2"].shape[1]     # 128 -> lane-dense output stores

    ib1 = params["img_b1"].reshape(1, H)
    ib2 = params["img_b2"].reshape(1, Dout)
    ab1 = params["aud_b1"].reshape(1, H)
    ab2 = params["aud_b2"].reshape(1, Dout)
    scale_in = params["logit_scale"].reshape(1, 1)

    operands = (image_emb, audio_emb,
                params["img_w1"], ib1, params["img_w2"], ib2,
                params["aud_w1"], ab1, params["aud_w2"], ab2,
                scale_in)

    flops = 2 * B * (Din_i * H + H * Dout) + 2 * B * (Din_a * H + H * Dout)
    transcendentals = 2 * B * H + 1                      # two tanh layers + exp
    bytes_accessed = sum(int(a.size) * a.dtype.itemsize for a in operands)
    bytes_accessed += 2 * B * Dout * 4 + 4               # outputs

    img_proj, aud_proj, scale_out = pl.pallas_call(
        fused_heads_kernel,
        out_shape=(
            jax.ShapeDtypeStruct((B, Dout), jnp.float32),
            jax.ShapeDtypeStruct((B, Dout), jnp.float32),
            jax.ShapeDtypeStruct((1, 1), jnp.float32),
        ),
        in_specs=[
            _full((B, Din_i)),                           # image embeddings
            _full((B, Din_a)),                           # audio embeddings
            _full((Din_i, H)), _full((1, H)),            # image W1 (bf16), b1
            _full((H, Dout)), _full((1, Dout)),          # image W2 (bf16), b2
            _full((Din_a, H)), _full((1, H)),            # audio W1 (bf16), b1
            _full((H, Dout)), _full((1, Dout)),          # audio W2 (bf16), b2
            _full((1, 1)),                               # logit_scale param
        ],
        out_specs=(
            _full((B, Dout)),                            # image projection
            _full((B, Dout)),                            # audio projection
            _full((1, 1)),                               # logit_scale
        ),
        compiler_params=pltpu.CompilerParams(
            vmem_limit_bytes=2 * 1024 * 1024,            # footprint << 1 MiB
        ),
        cost_estimate=pl.CostEstimate(
            flops=flops,
            transcendentals=transcendentals,
            bytes_accessed=bytes_accessed),
    )(*operands)

    return img_proj, aud_proj, scale_out[0, 0]


def image_only_heads(params, image_emb):
    B, Din_i = image_emb.shape
    H = params["img_w1"].shape[1]
    Dout = params["img_w2"].shape[1]
    ib1 = params["img_b1"].reshape(1, H)
    ib2 = params["img_b2"].reshape(1, Dout)
    scale_in = params["logit_scale"].reshape(1, 1)

    proj, scale_out = pl.pallas_call(
        image_only_kernel,
        out_shape=(jax.ShapeDtypeStruct((B, Dout), jnp.float32),
                   jax.ShapeDtypeStruct((1, 1), jnp.float32)),
        in_specs=[
            _full((B, Din_i)),
            _full((Din_i, H)), _full((1, H)),
            _full((H, Dout)), _full((1, Dout)),
            _full((1, 1)),
        ],
        out_specs=(_full((B, Dout)), _full((1, 1))),
        compiler_params=pltpu.CompilerParams(
            vmem_limit_bytes=2 * 1024 * 1024),
    )(image_emb, params["img_w1"], ib1, params["img_w2"], ib2, scale_in)
    return proj, scale_out[0, 0]


# ----------------------------------------------------------------------------
# Model glue (embedding-level forward; encoders are external checkpoints)
# ----------------------------------------------------------------------------
class Config:
    image_embedding_size = 256   # ViT pooler_output dim (small synthetic)
    audio_embedding_size = 128   # CLAP audio-feature dim (small synthetic)
    mlp_hidden_size = 128
    shared_embedding_size = 128  # multiple of 128 (lane-dense stores)
    has_audio_mapper = True


def init_linear(key, d_in, d_out):
    # Deterministic stand-in for torch.nn.Linear's uniform(-1/sqrt(d_in), ...).
    kw, kb = jax.random.split(key)
    bound = 1.0 / jnp.sqrt(jnp.float32(d_in))
    w = jax.random.uniform(kw, (d_in, d_out), jnp.float32, -bound, bound)
    b = jax.random.uniform(kb, (d_out,), jnp.float32, -bound, bound)
    # Weights stored bf16 (dominant HBM bytes, native MXU path); biases f32.
    return w.astype(jnp.bfloat16), b


def init_params(cfg, key):
    keys = jax.random.split(key, 4)
    params = {}
    params["img_w1"], params["img_b1"] = init_linear(
        keys[0], cfg.image_embedding_size, cfg.mlp_hidden_size)
    params["img_w2"], params["img_b2"] = init_linear(
        keys[1], cfg.mlp_hidden_size, cfg.shared_embedding_size)
    if cfg.has_audio_mapper:
        params["aud_w1"], params["aud_b1"] = init_linear(
            keys[2], cfg.audio_embedding_size, cfg.mlp_hidden_size)
        params["aud_w2"], params["aud_b2"] = init_linear(
            keys[3], cfg.mlp_hidden_size, cfg.shared_embedding_size)
    params["logit_scale"] = jnp.float32(1.0)  # torch.nn.Parameter(tensor(1.0))
    return params


def picture_to_music_forward(params, cfg, image_emb, audio_emb):
    # TODO(synk): ViT / CLAP pretrained encoders are external HF checkpoints;
    # this forward consumes their output embeddings directly.
    if cfg.has_audio_mapper:
        return fused_heads(params, image_emb, audio_emb)
    image_proj, logit_scale = image_only_heads(params, image_emb)
    return image_proj, audio_emb, logit_scale


# ----------------------------------------------------------------------------
# Reference (plain JAX, same bf16-rounded operands as the kernel)
# ----------------------------------------------------------------------------
def ref_mapper(x, w1_bf16, b1, w2_bf16, b2):
    w1 = w1_bf16.astype(jnp.float32)
    w2 = w2_bf16.astype(jnp.float32)
    xb = x.astype(jnp.bfloat16).astype(jnp.float32)
    h = jnp.tanh(jnp.dot(xb, w1, preferred_element_type=jnp.float32) + b1)
    hb = h.astype(jnp.bfloat16).astype(jnp.float32)
    return jnp.dot(hb, w2, preferred_element_type=jnp.float32) + b2


if __name__ == "__main__":
    cfg = Config()
    key = jax.random.PRNGKey(0)
    kp, ki, ka = jax.random.split(key, 3)

    params = init_params(cfg, kp)

    batch = 8
    # Synthetic encoder outputs (stand-ins for ViT pooler / CLAP audio feats).
    image_emb = jax.random.normal(ki, (batch, cfg.image_embedding_size), jnp.float32)
    audio_emb = jax.random.normal(ka, (batch, cfg.audio_embedding_size), jnp.float32)

    image_proj, audio_proj, logit_scale = picture_to_music_forward(
        params, cfg, image_emb, audio_emb)
    jax.block_until_ready((image_proj, audio_proj, logit_scale))

    # Reference checks.
    ref_img = ref_mapper(image_emb, params["img_w1"], params["img_b1"],
                         params["img_w2"], params["img_b2"])
    ref_aud = ref_mapper(audio_emb, params["aud_w1"], params["aud_b1"],
                         params["aud_w2"], params["aud_b2"])
    ref_scale = jnp.clip(jnp.exp(jnp.float32(1.0)), 0.0, 100.0)

    assert image_proj.shape == (batch, cfg.shared_embedding_size)
    assert audio_proj.shape == (batch, cfg.shared_embedding_size)
    assert jnp.allclose(image_proj, ref_img, atol=1e-3, rtol=1e-3)
    assert jnp.allclose(audio_proj, ref_aud, atol=1e-3, rtol=1e-3)
    assert jnp.allclose(logit_scale, ref_scale, rtol=1e-4)

    # Exercise the has_audio_mapper=False path too (single-mapper kernel).
    cfg_no_aud = Config()
    cfg_no_aud.has_audio_mapper = False
    img2, aud2, sc2 = picture_to_music_forward(params, cfg_no_aud,
                                               image_emb, audio_emb)
    jax.block_until_ready((img2, aud2, sc2))
    assert jnp.allclose(img2, ref_img, atol=1e-3, rtol=1e-3)
    assert jnp.allclose(aud2, audio_emb)
    assert jnp.allclose(sc2, ref_scale, rtol=1e-4)

    print("KERNEL_OK")
</pallas_src>

<mosaic_0001>
module attributes {stable_mosaic.version = 11 : i64} {
  func.func @fused_heads_kernel(%arg0: memref<8x256xf32, #tpu.memory_space<vmem>>, %arg1: memref<8x128xf32, #tpu.memory_space<vmem>>, %arg2: memref<256x128xbf16, #tpu.memory_space<vmem>>, %arg3: memref<1x128xf32, #tpu.memory_space<vmem>>, %arg4: memref<128x128xbf16, #tpu.memory_space<vmem>>, %arg5: memref<1x128xf32, #tpu.memory_space<vmem>>, %arg6: memref<128x128xbf16, #tpu.memory_space<vmem>>, %arg7: memref<1x128xf32, #tpu.memory_space<vmem>>, %arg8: memref<128x128xbf16, #tpu.memory_space<vmem>>, %arg9: memref<1x128xf32, #tpu.memory_space<vmem>>, %arg10: memref<1x1xf32, #tpu.memory_space<vmem>>, %arg11: memref<8x128xf32, #tpu.memory_space<vmem>>, %arg12: memref<8x128xf32, #tpu.memory_space<vmem>>, %arg13: memref<1x1xf32, #tpu.memory_space<vmem>>) attributes {dimension_semantics = [], scalar_prefetch = 0 : i64, scratch_operands = 0 : i64, tpu.core_type = #tpu.core_type<tc>} {
    %c0 = arith.constant 0 : index
    %c0_0 = arith.constant 0 : index
    %0 = vector.load %arg0[%c0, %c0_0] : memref<8x256xf32, #tpu.memory_space<vmem>>, vector<8x256xf32>
    %1 = arith.truncf %0 : vector<8x256xf32> to vector<8x256xbf16>
    %c0_1 = arith.constant 0 : index
    %c0_2 = arith.constant 0 : index
    %2 = vector.load %arg2[%c0_1, %c0_2] : memref<256x128xbf16, #tpu.memory_space<vmem>>, vector<256x128xbf16>
    %cst = arith.constant dense<0.000000e+00> : vector<8x128xf32>
    %3 = tpu.matmul %1, %2, %cst {dimension_numbers = #tpu.dot_dimension_numbers<[1], [0], [0], [1], [0, 0, 1, 1], [], []>} : vector<8x256xbf16>, vector<256x128xbf16>, vector<8x128xf32> -> vector<8x128xf32>
    %c0_3 = arith.constant 0 : index
    %c0_4 = arith.constant 0 : index
    %4 = vector.load %arg3[%c0_3, %c0_4] : memref<1x128xf32, #tpu.memory_space<vmem>>, vector<1x128xf32>
    %5 = vector.broadcast %4 : vector<1x128xf32> to vector<8x128xf32>
    %6 = arith.addf %3, %5 : vector<8x128xf32>
    %7 = math.tanh %6 : vector<8x128xf32>
    %8 = arith.truncf %7 : vector<8x128xf32> to vector<8x128xbf16>
    %c0_5 = arith.constant 0 : index
    %c0_6 = arith.constant 0 : index
    %9 = vector.load %arg4[%c0_5, %c0_6] : memref<128x128xbf16, #tpu.memory_space<vmem>>, vector<128x128xbf16>
    %cst_7 = arith.constant dense<0.000000e+00> : vector<8x128xf32>
    %10 = tpu.matmul %8, %9, %cst_7 {dimension_numbers = #tpu.dot_dimension_numbers<[1], [0], [0], [1], [0, 0, 1, 1], [], []>} : vector<8x128xbf16>, vector<128x128xbf16>, vector<8x128xf32> -> vector<8x128xf32>
    %c0_8 = arith.constant 0 : index
    %c0_9 = arith.constant 0 : index
    %11 = vector.load %arg5[%c0_8, %c0_9] : memref<1x128xf32, #tpu.memory_space<vmem>>, vector<1x128xf32>
    %12 = vector.broadcast %11 : vector<1x128xf32> to vector<8x128xf32>
    %13 = arith.addf %10, %12 : vector<8x128xf32>
    %c0_10 = arith.constant 0 : index
    %c0_11 = arith.constant 0 : index
    %14 = vector.load %arg11[%c0_10, %c0_11] : memref<8x128xf32, #tpu.memory_space<vmem>>, vector<8x128xf32>
    tpu.vector_store %arg11[%c0_10, %c0_11], %13 {strides = array<i32>} : memref<8x128xf32, #tpu.memory_space<vmem>>, vector<8x128xf32>,
    %c0_12 = arith.constant 0 : index
    %c0_13 = arith.constant 0 : index
    %15 = vector.load %arg1[%c0_12, %c0_13] : memref<8x128xf32, #tpu.memory_space<vmem>>, vector<8x128xf32>
    %16 = arith.truncf %15 : vector<8x128xf32> to vector<8x128xbf16>
    %c0_14 = arith.constant 0 : index
    %c0_15 = arith.constant 0 : index
    %17 = vector.load %arg6[%c0_14, %c0_15] : memref<128x128xbf16, #tpu.memory_space<vmem>>, vector<128x128xbf16>
    %cst_16 = arith.constant dense<0.000000e+00> : vector<8x128xf32>
    %18 = tpu.matmul %16, %17, %cst_16 {dimension_numbers = #tpu.dot_dimension_numbers<[1], [0], [0], [1], [0, 0, 1, 1], [], []>} : vector<8x128xbf16>, vector<128x128xbf16>, vector<8x128xf32> -> vector<8x128xf32>
    %c0_17 = arith.constant 0 : index
    %c0_18 = arith.constant 0 : index
    %19 = vector.load %arg7[%c0_17, %c0_18] : memref<1x128xf32, #tpu.memory_space<vmem>>, vector<1x128xf32>
    %20 = vector.broadcast %19 : vector<1x128xf32> to vector<8x128xf32>
    %21 = arith.addf %18, %20 : vector<8x128xf32>
    %22 = math.tanh %21 : vector<8x128xf32>
    %23 = arith.truncf %22 : vector<8x128xf32> to vector<8x128xbf16>
    %c0_19 = arith.constant 0 : index
    %c0_20 = arith.constant 0 : index
    %24 = vector.load %arg8[%c0_19, %c0_20] : memref<128x128xbf16, #tpu.memory_space<vmem>>, vector<128x128xbf16>
    %cst_21 = arith.constant dense<0.000000e+00> : vector<8x128xf32>
    %25 = tpu.matmul %23, %24, %cst_21 {dimension_numbers = #tpu.dot_dimension_numbers<[1], [0], [0], [1], [0, 0, 1, 1], [], []>} : vector<8x128xbf16>, vector<128x128xbf16>, vector<8x128xf32> -> vector<8x128xf32>
    %c0_22 = arith.constant 0 : index
    %c0_23 = arith.constant 0 : index
    %26 = vector.load %arg9[%c0_22, %c0_23] : memref<1x128xf32, #tpu.memory_space<vmem>>, vector<1x128xf32>
    %27 = vector.broadcast %26 : vector<1x128xf32> to vector<8x128xf32>
    %28 = arith.addf %25, %27 : vector<8x128xf32>
    %c0_24 = arith.constant 0 : index
    %c0_25 = arith.constant 0 : index
    %29 = vector.load %arg12[%c0_24, %c0_25] : memref<8x128xf32, #tpu.memory_space<vmem>>, vector<8x128xf32>
    tpu.vector_store %arg12[%c0_24, %c0_25], %28 {strides = array<i32>} : memref<8x128xf32, #tpu.memory_space<vmem>>, vector<8x128xf32>,
    %c0_26 = arith.constant 0 : index
    %c0_27 = arith.constant 0 : index
    %30 = vector.load %arg10[%c0_26, %c0_27] : memref<1x1xf32, #tpu.memory_space<vmem>>, vector<1x1xf32>
    %31 = math.exp %30 : vector<1x1xf32>
    %cst_28 = arith.constant 0.000000e+00 : f32
    %cst_29 = arith.constant 1.000000e+02 : f32
    %32 = vector.broadcast %cst_28 : f32 to vector<1x1xf32>
    %33 = arith.maximumf %32, %31 : vector<1x1xf32>
    %34 = vector.broadcast %cst_29 : f32 to vector<1x1xf32>
    %35 = arith.minimumf %34, %33 : vector<1x1xf32>
    %c0_30 = arith.constant 0 : index
    %c0_31 = arith.constant 0 : index
    %36 = vector.load %arg13[%c0_30, %c0_31] : memref<1x1xf32, #tpu.memory_space<vmem>>, vector<1x1xf32>
    tpu.vector_store %arg13[%c0_30, %c0_31], %35 {strides = array<i32>} : memref<1x1xf32, #tpu.memory_space<vmem>>, vector<1x1xf32>,
    return
  }
}

</mosaic_0001>

<llo_original>
// kernel: tpu_custom_call.1
$region0: #{tpu_custom_call.1}
  #allocation0 [shape = 'u32[]', space=smem, size = 0x4, offset = 0x4, fixed_abs, tag = 'smem constant byte address 0x4 - core index']
  #allocation1 [shape = 'u32[144,128]{1,0:T(1,128)}', space=vmem, size = 0x12000, scoped, tag = 'internal scratch']
  #allocation2 [shape = 'f32[1,1]{1,0:T(1,128)S(1)}', space=vmem, size = 0x200, scoped, tag = 'scoped memory for tpu_custom_call.1']
  %s0 = inlined_call_operand.hbm [shape: f32[8,256], index: 0, kind: input, shape index: {}]
  %s1 = inlined_call_operand.hbm [shape: f32[8,128], index: 1, kind: input, shape index: {}]
  %s2 = inlined_call_operand.hbm [shape: bf16[256,128], index: 2, kind: input, shape index: {}]
  %s3 = inlined_call_operand.vmem [shape: f32[1,128], index: 3, kind: input, shape index: {}]
  %s4 = inlined_call_operand.hbm [shape: bf16[128,128], index: 4, kind: input, shape index: {}]
  %s5 = inlined_call_operand.vmem [shape: f32[1,128], index: 5, kind: input, shape index: {}]
  %s6 = inlined_call_operand.hbm [shape: bf16[128,128], index: 6, kind: input, shape index: {}]
  %s7 = inlined_call_operand.vmem [shape: f32[1,128], index: 7, kind: input, shape index: {}]
  %s8 = inlined_call_operand.hbm [shape: bf16[128,128], index: 8, kind: input, shape index: {}]
  %s9 = inlined_call_operand.vmem [shape: f32[1,128], index: 9, kind: input, shape index: {}]
  %s10 = inlined_call_operand.<no memory space> [shape: f32[1,1], index: 10, kind: input, shape index: {}]
  %s11 = inlined_call_operand.hbm [shape: f32[8,128], index: 11, kind: output, shape index: {0}]
  %s12 = inlined_call_operand.hbm [shape: f32[8,128], index: 12, kind: output, shape index: {1}]
  %s13 = inlined_call_operand.hbm [shape: f32[1,1], index: 13, kind: output, shape index: {2}]
  %14 = xla_tuple %s11, %s12, %s13
  %s15 = sld [smem:[#allocation0]]
  $region94: #{tpu_custom_call.1} parent=0
    _
  %s17 = ssub.s32 1, %s15
  %s18 = scalar_select 0, %s17, %s15
  %v19 = vstv %s10
  %20 = vst [vmem:[#allocation2] sm:$0x1] %v19
  $region1: #{tpu_custom_call.1} parent=0
    #allocation3 [shape = 'u8[8192]{0}', space=vmem, size = 0x2000, scoped, tag = 'input window, operand 0, single buffered']
    #allocation4 [shape = 's32[1]{0}', space=sflag, size = 0x4, scoped, tag = 'scoped memory for tpu_custom_call.1']
    #allocation5 [shape = 's32[1]{0}', space=sflag, size = 0x4, scoped, tag = 'scoped memory for tpu_custom_call.1']
    #allocation6 [shape = 'u8[4096]{0}', space=vmem, size = 0x1000, scoped, tag = 'input window, operand 1, single buffered']
    #allocation7 [shape = 's32[1]{0}', space=sflag, size = 0x4, scoped, tag = 'scoped memory for tpu_custom_call.1']
    #allocation8 [shape = 'u8[65536]{0}', space=vmem, size = 0x10000, scoped, tag = 'input window, operand 2, single buffered']
    #allocation9 [shape = 'u8[32768]{0}', space=vmem, size = 0x8000, scoped, tag = 'input window, operand 4, single buffered']
    #allocation10 [shape = 's32[1]{0}', space=sflag, size = 0x4, scoped, tag = 'scoped memory for tpu_custom_call.1']
    #allocation11 [shape = 'u8[32768]{0}', space=vmem, size = 0x8000, scoped, tag = 'input window, operand 6, single buffered']
    #allocation12 [shape = 'u8[32768]{0}', space=vmem, size = 0x8000, scoped, tag = 'input window, operand 8, single buffered']
    #allocation13 [shape = 's32[1]{0}', space=sflag, size = 0x4, scoped, tag = 'scoped memory for tpu_custom_call.1']
    #allocation14 [shape = 'u8[4096]{0}', space=vmem, size = 0x1000, scoped, tag = 'output window, operand 0, single buffered']
    #allocation15 [shape = 'u8[4096]{0}', space=vmem, size = 0x1000, scoped, tag = 'output window, operand 1, single buffered']
    #allocation16 [shape = 's32[1]{0}', space=sflag, size = 0x4, scoped, tag = 'scoped memory for tpu_custom_call.1']
    #allocation17 [shape = 'u8[512]{0}', space=vmem, size = 0x400, scoped, tag = 'output window, operand 2, single buffered']
    %21 = vsyncpa [#allocation4], 0
    %22 = vsyncpa [#allocation7], 0
    %23 = vsyncpa [#allocation10], 0
    %24 = vsyncpa [#allocation13], 0
    %25 = vsyncpa [#allocation5], 0
    %26 = vsyncpa [#allocation16], 0
    // Predicated region
    $region2: #{tpu_custom_call.1} parent=1 // pred_check
      _
    $region3: #{tpu_custom_call.1} parent=1 // pred_check_branch
      %28 = sbr.rel (0) target = $region5
    $region4: #{tpu_custom_call.1} parent=1 // pred_region
      %s30 = ssub.s32 256, 256
      %31 = vsyncadd [#allocation4], %s30
      %s33 = sshll.u32 [#allocation3], 4
      %s34 = int_to_ptr.vmem [resolvable:$true] %s33
      %36 = dma.hbm_to_vmem [thread:$0]  %s0, 256, %s34, [#allocation4]
    $region5: #{tpu_custom_call.1} parent=1 // pred_fallthru
      _
    // Predicated region
    $region6: #{tpu_custom_call.1} parent=1 // pred_check
      _
    $region7: #{tpu_custom_call.1} parent=1 // pred_check_branch
      %38 = sbr.rel (0) target = $region9
    $region8: #{tpu_custom_call.1} parent=1 // pred_region
      %s40 = ssub.s32 128, 128
      %41 = vsyncadd [#allocation7], %s40
      %s43 = sshll.u32 [#allocation6], 4
      %s44 = int_to_ptr.vmem [resolvable:$true] %s43
      %46 = dma.hbm_to_vmem [thread:$0]  %s1, 128, %s44, [#allocation7]
    $region9: #{tpu_custom_call.1} parent=1 // pred_fallthru
      _
    // Predicated region
    $region10: #{tpu_custom_call.1} parent=1 // pred_check
      _
    $region11: #{tpu_custom_call.1} parent=1 // pred_check_branch
      %48 = sbr.rel (0) target = $region13
    $region12: #{tpu_custom_call.1} parent=1 // pred_region
      %s50 = ssub.s32 2048, 2048
      %51 = vsyncadd [#allocation7], %s50
      %s52 = sshll.u32 [#allocation8], 4
      %s53 = int_to_ptr.vmem [resolvable:$true] %s52
      %58 = dma.hbm_to_vmem [thread:$0]  %s2, 2048, %s53, [#allocation7], 64, 64, 4
    $region13: #{tpu_custom_call.1} parent=1 // pred_fallthru
      _
    // Predicated region
    $region14: #{tpu_custom_call.1} parent=1 // pred_check
      _
    $region15: #{tpu_custom_call.1} parent=1 // pred_check_branch
      %60 = sbr.rel (0) target = $region17
    $region16: #{tpu_custom_call.1} parent=1 // pred_region
      _
    $region17: #{tpu_custom_call.1} parent=1 // pred_fallthru
      _
    // Predicated region
    $region18: #{tpu_custom_call.1} parent=1 // pred_check
      _
    $region19: #{tpu_custom_call.1} parent=1 // pred_check_branch
      %62 = sbr.rel (0) target = $region21
    $region20: #{tpu_custom_call.1} parent=1 // pred_region
      %s64 = ssub.s32 1024, 1024
      %65 = vsyncadd [#allocation10], %s64
      %s66 = sshll.u32 [#allocation9], 4
      %s67 = int_to_ptr.vmem [resolvable:$true] %s66
      %72 = dma.hbm_to_vmem [thread:$0]  %s4, 1024, %s67, [#allocation10], 64, 64, 4
    $region21: #{tpu_custom_call.1} parent=1 // pred_fallthru
      _
    // Predicated region
    $region22: #{tpu_custom_call.1} parent=1 // pred_check
      _
    $region23: #{tpu_custom_call.1} parent=1 // pred_check_branch
      %74 = sbr.rel (0) target = $region25
    $region24: #{tpu_custom_call.1} parent=1 // pred_region
      _
    $region25: #{tpu_custom_call.1} parent=1 // pred_fallthru
      _
    // Predicated region
    $region26: #{tpu_custom_call.1} parent=1 // pred_check
      _
    $region27: #{tpu_custom_call.1} parent=1 // pred_check_branch
      %76 = sbr.rel (0) target = $region29
    $region28: #{tpu_custom_call.1} parent=1 // pred_region
      %s78 = ssub.s32 1024, 1024
      %79 = vsyncadd [#allocation10], %s78
      %s80 = sshll.u32 [#allocation11], 4
      %s81 = int_to_ptr.vmem [resolvable:$true] %s80
      %86 = dma.hbm_to_vmem [thread:$0]  %s6, 1024, %s81, [#allocation10], 64, 64, 4
    $region29: #{tpu_custom_call.1} parent=1 // pred_fallthru
      _
    // Predicated region
    $region30: #{tpu_custom_call.1} parent=1 // pred_check
      _
    $region31: #{tpu_custom_call.1} parent=1 // pred_check_branch
      %88 = sbr.rel (0) target = $region33
    $region32: #{tpu_custom_call.1} parent=1 // pred_region
      _
    $region33: #{tpu_custom_call.1} parent=1 // pred_fallthru
      _
    // Predicated region
    $region34: #{tpu_custom_call.1} parent=1 // pred_check
      _
    $region35: #{tpu_custom_call.1} parent=1 // pred_check_branch
      %90 = sbr.rel (0) target = $region37
    $region36: #{tpu_custom_call.1} parent=1 // pred_region
      %s92 = ssub.s32 1024, 1024
      %93 = vsyncadd [#allocation13], %s92
      %s94 = sshll.u32 [#allocation12], 4
      %s95 = int_to_ptr.vmem [resolvable:$true] %s94
      %100 = dma.hbm_to_vmem [thread:$0]  %s8, 1024, %s95, [#allocation13], 64, 64, 4
    $region37: #{tpu_custom_call.1} parent=1 // pred_fallthru
      _
    // Predicated region
    $region38: #{tpu_custom_call.1} parent=1 // pred_check
      _
    $region39: #{tpu_custom_call.1} parent=1 // pred_check_branch
      %102 = sbr.rel (0) target = $region41
    $region40: #{tpu_custom_call.1} parent=1 // pred_region
      _
    $region41: #{tpu_custom_call.1} parent=1 // pred_fallthru
      _
    // Predicated region
    $region42: #{tpu_custom_call.1} parent=1 // pred_check
      _
    $region43: #{tpu_custom_call.1} parent=1 // pred_check_branch
      %104 = sbr.rel (0) target = $region45
    $region44: #{tpu_custom_call.1} parent=1 // pred_region
      _
    $region45: #{tpu_custom_call.1} parent=1 // pred_fallthru
      _
    // Predicated region
    $region46: #{tpu_custom_call.1} parent=1 // pred_check
      _
    $region47: #{tpu_custom_call.1} parent=1 // pred_check_branch
      %106 = sbr.rel (0) target = $region49
    $region48: #{tpu_custom_call.1} parent=1 // pred_region
      %107 = dma.done [#allocation4], 256
    $region49: #{tpu_custom_call.1} parent=1 // pred_fallthru
      _
    // Predicated region
    $region50: #{tpu_custom_call.1} parent=1 // pred_check
      _
    $region51: #{tpu_custom_call.1} parent=1 // pred_check_branch
      %109 = sbr.rel (0) target = $region53
    $region52: #{tpu_custom_call.1} parent=1 // pred_region
      %110 = dma.done [#allocation7], 128
    $region53: #{tpu_custom_call.1} parent=1 // pred_fallthru
      _
    // Predicated region
    $region54: #{tpu_custom_call.1} parent=1 // pred_check
      _
    $region55: #{tpu_custom_call.1} parent=1 // pred_check_branch
      %112 = sbr.rel (0) target = $region57
    $region56: #{tpu_custom_call.1} parent=1 // pred_region
      %113 = dma.done [#allocation7], 2048
    $region57: #{tpu_custom_call.1} parent=1 // pred_fallthru
      _
    // Predicated region
    $region58: #{tpu_custom_call.1} parent=1 // pred_check
      _
    $region59: #{tpu_custom_call.1} parent=1 // pred_check_branch
      %115 = sbr.rel (0) target = $region61
    $region60: #{tpu_custom_call.1} parent=1 // pred_region
      %116 = dma.done [#allocation10], 1024
    $region61: #{tpu_custom_call.1} parent=1 // pred_fallthru
      _
    // Predicated region
    $region62: #{tpu_custom_call.1} parent=1 // pred_check
      _
    $region63: #{tpu_custom_call.1} parent=1 // pred_check_branch
      %118 = sbr.rel (0) target = $region65
    $region64: #{tpu_custom_call.1} parent=1 // pred_region
      %119 = dma.done [#allocation10], 1024
    $region65: #{tpu_custom_call.1} parent=1 // pred_fallthru
      _
    // Predicated region
    $region66: #{tpu_custom_call.1} parent=1 // pred_check
      _
    $region67: #{tpu_custom_call.1} parent=1 // pred_check_branch
      %121 = sbr.rel (0) target = $region69
    $region68: #{tpu_custom_call.1} parent=1 // pred_region
      %122 = dma.done [#allocation13], 1024
    $region69: #{tpu_custom_call.1} parent=1 // pred_fallthru
      _
    %v124 = vld [vmem:[#allocation3] sm:$0xff]
    %v125 = vld [vmem:[#allocation3 + $0x8] sm:$0xff]
    %v126 = vpack.c.bf16 %v124, %v124
    %v127 = vpack.c.bf16 %v125, %v125
    %v128 = vld [vmem:[#allocation8] sm:$0xf]
    %v129 = vld [vmem:[#allocation8 + $0x4] sm:$0xf]
    %v130 = vld [vmem:[#allocation8 + $0x8] sm:$0xf]
    %v131 = vld [vmem:[#allocation8 + $0xc] sm:$0xf]
    %v132 = vld [vmem:[#allocation8 + $0x10] sm:$0xf]
    %v133 = vld [vmem:[#allocation8 + $0x14] sm:$0xf]
    %v134 = vld [vmem:[#allocation8 + $0x18] sm:$0xf]
    %v135 = vld [vmem:[#allocation8 + $0x1c] sm:$0xf]
    %v136 = vld [vmem:[#allocation8 + $0x20] sm:$0xf]
    %v137 = vld [vmem:[#allocation8 + $0x24] sm:$0xf]
    %v138 = vld [vmem:[#allocation8 + $0x28] sm:$0xf]
    %v139 = vld [vmem:[#allocation8 + $0x2c] sm:$0xf]
    %v140 = vld [vmem:[#allocation8 + $0x30] sm:$0xf]
    %v141 = vld [vmem:[#allocation8 + $0x34] sm:$0xf]
    %v142 = vld [vmem:[#allocation8 + $0x38] sm:$0xf]
    %v143 = vld [vmem:[#allocation8 + $0x3c] sm:$0xf]
    %v144 = vld [vmem:[#allocation8 + $0x40] sm:$0xf]
    %v145 = vld [vmem:[#allocation8 + $0x44] sm:$0xf]
    %v146 = vld [vmem:[#allocation8 + $0x48] sm:$0xf]
    %v147 = vld [vmem:[#allocation8 + $0x4c] sm:$0xf]
    %v148 = vld [vmem:[#allocation8 + $0x50] sm:$0xf]
    %v149 = vld [vmem:[#allocation8 + $0x54] sm:$0xf]
    %v150 = vld [vmem:[#allocation8 + $0x58] sm:$0xf]
    %v151 = vld [vmem:[#allocation8 + $0x5c] sm:$0xf]
    %v152 = vld [vmem:[#allocation8 + $0x60] sm:$0xf]
    %v153 = vld [vmem:[#allocation8 + $0x64] sm:$0xf]
    %v154 = vld [vmem:[#allocation8 + $0x68] sm:$0xf]
    %v155 = vld [vmem:[#allocation8 + $0x6c] sm:$0xf]
    %v156 = vld [vmem:[#allocation8 + $0x70] sm:$0xf]
    %v157 = vld [vmem:[#allocation8 + $0x74] sm:$0xf]
    %v158 = vld [vmem:[#allocation8 + $0x78] sm:$0xf]
    %v159 = vld [vmem:[#allocation8 + $0x7c] sm:$0xf]
    %v160 = vld [vmem:[%s3] sm:$0x1]
    %v162 = vlaneseq
    %v163 = vshrl.u32 %v162, 7
    %v164 = vsub.s32 0, %v163
    %v165 = vrot.slane %v160, %v164
    %v199 = vunpack.c.l.b16 %v128
    %v200 = vunpack.c.l.b16 %v129
    %v201 = vunpack.c.l.b16 %v130
    %v202 = vunpack.c.l.b16 %v131
    %v203 = vunpack.c.l.b16 %v132
    %v204 = vunpack.c.l.b16 %v133
    %v205 = vunpack.c.l.b16 %v134
    %v206 = vunpack.c.l.b16 %v135
    %v207 = vunpack.c.l.b16 %v136
    %v208 = vunpack.c.l.b16 %v137
    %v209 = vunpack.c.l.b16 %v138
    %v210 = vunpack.c.l.b16 %v139
    %v211 = vunpack.c.l.b16 %v140
    %v212 = vunpack.c.l.b16 %v141
    %v213 = vunpack.c.l.b16 %v142
    %v214 = vunpack.c.l.b16 %v143
    %v215 = vunpack.c.l.b16 %v144
    %v216 = vunpack.c.l.b16 %v145
    %v217 = vunpack.c.l.b16 %v146
    %v218 = vunpack.c.l.b16 %v147
    %v219 = vunpack.c.l.b16 %v148
    %v220 = vunpack.c.l.b16 %v149
    %v221 = vunpack.c.l.b16 %v150
    %v222 = vunpack.c.l.b16 %v151
    %v223 = vunpack.c.l.b16 %v152
    %v224 = vunpack.c.l.b16 %v153
    %v225 = vunpack.c.l.b16 %v154
    %v226 = vunpack.c.l.b16 %v155
    %v227 = vunpack.c.l.b16 %v156
    %v228 = vunpack.c.l.b16 %v157
    %v229 = vunpack.c.l.b16 %v158
    %v230 = vunpack.c.l.b16 %v159
    %v231 = vpack.c.b16 %v200, %v199
    %v232 = vpack.c.b16 %v202, %v201
    %v233 = vpack.c.b16 %v204, %v203
    %v234 = vpack.c.b16 %v206, %v205
    %v235 = vpack.c.b16 %v208, %v207
    %v236 = vpack.c.b16 %v210, %v209
    %v237 = vpack.c.b16 %v212, %v211
    %v238 = vpack.c.b16 %v214, %v213
    %v239 = vpack.c.b16 %v216, %v215
    %v240 = vpack.c.b16 %v218, %v217
    %v241 = vpack.c.b16 %v220, %v219
    %v242 = vpack.c.b16 %v222, %v221
    %v243 = vpack.c.b16 %v224, %v223
    %v244 = vpack.c.b16 %v226, %v225
    %v245 = vpack.c.b16 %v228, %v227
    %v246 = vpack.c.b16 %v230, %v229
    %263 = vmatprep.subr.bf16.mxu0 0
    %264 = vmatpush1.bf16.msra.mxu0 %v231
    %265 = vmatprep.subr.bf16.mxu0 0
    %266 = vmatpush1.bf16.msra.mxu0 %v232
    %267 = vmatprep.subr.bf16.mxu0 0
    %268 = vmatpush1.bf16.msra.mxu0 %v233
    %269 = vmatprep.subr.bf16.mxu0 0
    %270 = vmatpush1.bf16.msra.mxu0 %v234
    %271 = vmatprep.subr.bf16.mxu0 0
    %272 = vmatpush1.bf16.msra.mxu0 %v235
    %273 = vmatprep.subr.bf16.mxu0 0
    %274 = vmatpush1.bf16.msra.mxu0 %v236
    %275 = vmatprep.subr.bf16.mxu0 0
    %276 = vmatpush1.bf16.msra.mxu0 %v237
    %277 = vmatprep.subr.bf16.mxu0 0
    %278 = vmatpush1.bf16.msra.mxu0 %v238
    %279 = vmatprep.subr.bf16.mxu0 0
    %280 = vmatpush1.bf16.msra.mxu0 %v239
    %281 = vmatprep.subr.bf16.mxu0 0
    %282 = vmatpush1.bf16.msra.mxu0 %v240
    %283 = vmatprep.subr.bf16.mxu0 0
    %284 = vmatpush1.bf16.msra.mxu0 %v241
    %285 = vmatprep.subr.bf16.mxu0 0
    %286 = vmatpush1.bf16.msra.mxu0 %v242
    %287 = vmatprep.subr.bf16.mxu0 0
    %288 = vmatpush1.bf16.msra.mxu0 %v243
    %289 = vmatprep.subr.bf16.mxu0 0
    %290 = vmatpush1.bf16.msra.mxu0 %v244
    %291 = vmatprep.subr.bf16.mxu0 0
    %292 = vmatpush1.bf16.msra.mxu0 %v245
    %293 = vmatprep.subr.bf16.mxu0 0
    %294 = vmatpush1.bf16.msra.mxu0 %v246
    %295 = vmatprep.mubr.bf16.mxu0 %v127
    %296 = vmatmul.mubr.bf16.gmra.mrb[0].mxu0 %v126
    %v297 = vpop.f32.mrb[0].mxu0
    %v298 = vadd.f32 %v165, %v297
    %v299 = vpop.f32.mrb[0].mxu0
    %v300 = vpop.f32.mrb[0].mxu0
    %v301 = vpop.f32.mrb[0].mxu0
    %302 = vdwg.mxu0
    %v303 = vtanh.pop %v298
    %v304 = vpack.c.bf16 %v303, %v303
    %v305 = vld [vmem:[#allocation9] sm:$0xf]
    %v306 = vld [vmem:[#allocation9 + $0x4] sm:$0xf]
    %v307 = vld [vmem:[#allocation9 + $0x8] sm:$0xf]
    %v308 = vld [vmem:[#allocation9 + $0xc] sm:$0xf]
    %v309 = vld [vmem:[#allocation9 + $0x10] sm:$0xf]
    %v310 = vld [vmem:[#allocation9 + $0x14] sm:$0xf]
    %v311 = vld [vmem:[#allocation9 + $0x18] sm:$0xf]
    %v312 = vld [vmem:[#allocation9 + $0x1c] sm:$0xf]
    %v313 = vld [vmem:[#allocation9 + $0x20] sm:$0xf]
    %v314 = vld [vmem:[#allocation9 + $0x24] sm:$0xf]
    %v315 = vld [vmem:[#allocation9 + $0x28] sm:$0xf]
    %v316 = vld [vmem:[#allocation9 + $0x2c] sm:$0xf]
    %v317 = vld [vmem:[#allocation9 + $0x30] sm:$0xf]
    %v318 = vld [vmem:[#allocation9 + $0x34] sm:$0xf]
    %v319 = vld [vmem:[#allocation9 + $0x38] sm:$0xf]
    %v320 = vld [vmem:[#allocation9 + $0x3c] sm:$0xf]
    %v321 = vld [vmem:[%s5] sm:$0x1]
    %v323 = vlaneseq
    %v324 = vshrl.u32 %v323, 7
    %v325 = vsub.s32 0, %v324
    %v326 = vrot.slane %v321, %v325
    %v344 = vunpack.c.l.b16 %v305
    %v345 = vunpack.c.l.b16 %v306
    %v346 = vunpack.c.l.b16 %v307
    %v347 = vunpack.c.l.b16 %v308
    %v348 = vunpack.c.l.b16 %v309
    %v349 = vunpack.c.l.b16 %v310
    %v350 = vunpack.c.l.b16 %v311
    %v351 = vunpack.c.l.b16 %v312
    %v352 = vunpack.c.l.b16 %v313
    %v353 = vunpack.c.l.b16 %v314
    %v354 = vunpack.c.l.b16 %v315
    %v355 = vunpack.c.l.b16 %v316
    %v356 = vunpack.c.l.b16 %v317
    %v357 = vunpack.c.l.b16 %v318
    %v358 = vunpack.c.l.b16 %v319
    %v359 = vunpack.c.l.b16 %v320
    %v360 = vpack.c.b16 %v345, %v344
    %v361 = vpack.c.b16 %v347, %v346
    %v362 = vpack.c.b16 %v349, %v348
    %v363 = vpack.c.b16 %v351, %v350
    %v364 = vpack.c.b16 %v353, %v352
    %v365 = vpack.c.b16 %v355, %v354
    %v366 = vpack.c.b16 %v357, %v356
    %v367 = vpack.c.b16 %v359, %v358
    %376 = vmatprep.subr.bf16.mxu0 0
    %377 = vmatpush1.bf16.msra.mxu0 %v360
    %378 = vmatprep.subr.bf16.mxu0 0
    %379 = vmatpush1.bf16.msra.mxu0 %v361
    %380 = vmatprep.subr.bf16.mxu0 0
    %381 = vmatpush1.bf16.msra.mxu0 %v362
    %382 = vmatprep.subr.bf16.mxu0 0
    %383 = vmatpush1.bf16.msra.mxu0 %v363
    %384 = vmatprep.subr.bf16.mxu0 0
    %385 = vmatpush1.bf16.msra.mxu0 %v364
    %386 = vmatprep.subr.bf16.mxu0 0
    %387 = vmatpush1.bf16.msra.mxu0 %v365
    %388 = vmatprep.subr.bf16.mxu0 0
    %389 = vmatpush1.bf16.msra.mxu0 %v366
    %390 = vmatprep.subr.bf16.mxu0 0
    %391 = vmatpush1.bf16.msra.mxu0 %v367
    %392 = vmatprep.subr.bf16.mxu0 0
    %393 = vmatpush1.bf16.msra.mxu0 0
    %394 = vmatprep.subr.bf16.mxu0 0
    %395 = vmatpush1.bf16.msra.mxu0 0
    %396 = vmatprep.subr.bf16.mxu0 0
    %397 = vmatpush1.bf16.msra.mxu0 0
    %398 = vmatprep.subr.bf16.mxu0 0
    %399 = vmatpush1.bf16.msra.mxu0 0
    %400 = vmatprep.subr.bf16.mxu0 0
    %401 = vmatpush1.bf16.msra.mxu0 0
    %402 = vmatprep.subr.bf16.mxu0 0
    %403 = vmatpush1.bf16.msra.mxu0 0
    %404 = vmatprep.subr.bf16.mxu0 0
    %405 = vmatpush1.bf16.msra.mxu0 0
    %406 = vmatprep.subr.bf16.mxu0 0
    %407 = vmatpush1.bf16.msra.mxu0 0
    %408 = vmatprep.mubr.bf16.mxu0 0
    %409 = vmatmul.mubr.bf16.gmra.mrb[0].mxu0 %v304
    %v410 = vpop.f32.mrb[0].mxu0
    %v411 = vadd.f32 %v326, %v410
    %v412 = vpop.f32.mrb[0].mxu0
    %v413 = vpop.f32.mrb[0].mxu0
    %v414 = vpop.f32.mrb[0].mxu0
    %415 = vdwg.mxu0
    %416 = vst [vmem:[#allocation14] sm:$0xff] %v411
    %v417 = vld [vmem:[#allocation6] sm:$0xff]
    %v418 = vpack.c.bf16 %v417, %v417
    %v419 = vld [vmem:[#allocation11] sm:$0xf]
    %v420 = vld [vmem:[#allocation11 + $0x4] sm:$0xf]
    %v421 = vld [vmem:[#allocation11 + $0x8] sm:$0xf]
    %v422 = vld [vmem:[#allocation11 + $0xc] sm:$0xf]
    %v423 = vld [vmem:[#allocation11 + $0x10] sm:$0xf]
    %v424 = vld [vmem:[#allocation11 + $0x14] sm:$0xf]
    %v425 = vld [vmem:[#allocation11 + $0x18] sm:$0xf]
    %v426 = vld [vmem:[#allocation11 + $0x1c] sm:$0xf]
    %v427 = vld [vmem:[#allocation11 + $0x20] sm:$0xf]
    %v428 = vld [vmem:[#allocation11 + $0x24] sm:$0xf]
    %v429 = vld [vmem:[#allocation11 + $0x28] sm:$0xf]
    %v430 = vld [vmem:[#allocation11 + $0x2c] sm:$0xf]
    %v431 = vld [vmem:[#allocation11 + $0x30] sm:$0xf]
    %v432 = vld [vmem:[#allocation11 + $0x34] sm:$0xf]
    %v433 = vld [vmem:[#allocation11 + $0x38] sm:$0xf]
    %v434 = vld [vmem:[#allocation11 + $0x3c] sm:$0xf]
    %v435 = vld [vmem:[%s7] sm:$0x1]
    %v437 = vlaneseq
    %v438 = vshrl.u32 %v437, 7
    %v439 = vsub.s32 0, %v438
    %v440 = vrot.slane %v435, %v439
    %v458 = vunpack.c.l.b16 %v419
    %v459 = vunpack.c.l.b16 %v420
    %v460 = vunpack.c.l.b16 %v421
    %v461 = vunpack.c.l.b16 %v422
    %v462 = vunpack.c.l.b16 %v423
    %v463 = vunpack.c.l.b16 %v424
    %v464 = vunpack.c.l.b16 %v425
    %v465 = vunpack.c.l.b16 %v426
    %v466 = vunpack.c.l.b16 %v427
    %v467 = vunpack.c.l.b16 %v428
    %v468 = vunpack.c.l.b16 %v429
    %v469 = vunpack.c.l.b16 %v430
    %v470 = vunpack.c.l.b16 %v431
    %v471 = vunpack.c.l.b16 %v432
    %v472 = vunpack.c.l.b16 %v433
    %v473 = vunpack.c.l.b16 %v434
    %v474 = vpack.c.b16 %v459, %v458
    %v475 = vpack.c.b16 %v461, %v460
    %v476 = vpack.c.b16 %v463, %v462
    %v477 = vpack.c.b16 %v465, %v464
    %v478 = vpack.c.b16 %v467, %v466
    %v479 = vpack.c.b16 %v469, %v468
    %v480 = vpack.c.b16 %v471, %v470
    %v481 = vpack.c.b16 %v473, %v472
    %490 = vmatprep.subr.bf16.mxu0 0
    %491 = vmatpush1.bf16.msra.mxu0 %v474
    %492 = vmatprep.subr.bf16.mxu0 0
    %493 = vmatpush1.bf16.msra.mxu0 %v475
    %494 = vmatprep.subr.bf16.mxu0 0
    %495 = vmatpush1.bf16.msra.mxu0 %v476
    %496 = vmatprep.subr.bf16.mxu0 0
    %497 = vmatpush1.bf16.msra.mxu0 %v477
    %498 = vmatprep.subr.bf16.mxu0 0
    %499 = vmatpush1.bf16.msra.mxu0 %v478
    %500 = vmatprep.subr.bf16.mxu0 0
    %501 = vmatpush1.bf16.msra.mxu0 %v479
    %502 = vmatprep.subr.bf16.mxu0 0
    %503 = vmatpush1.bf16.msra.mxu0 %v480
    %504 = vmatprep.subr.bf16.mxu0 0
    %505 = vmatpush1.bf16.msra.mxu0 %v481
    %506 = vmatprep.subr.bf16.mxu0 0
    %507 = vmatpush1.bf16.msra.mxu0 0
    %508 = vmatprep.subr.bf16.mxu0 0
    %509 = vmatpush1.bf16.msra.mxu0 0
    %510 = vmatprep.subr.bf16.mxu0 0
    %511 = vmatpush1.bf16.msra.mxu0 0
    %512 = vmatprep.subr.bf16.mxu0 0
    %513 = vmatpush1.bf16.msra.mxu0 0
    %514 = vmatprep.subr.bf16.mxu0 0
    %515 = vmatpush1.bf16.msra.mxu0 0
    %516 = vmatprep.subr.bf16.mxu0 0
    %517 = vmatpush1.bf16.msra.mxu0 0
    %518 = vmatprep.subr.bf16.mxu0 0
    %519 = vmatpush1.bf16.msra.mxu0 0
    %520 = vmatprep.subr.bf16.mxu0 0
    %521 = vmatpush1.bf16.msra.mxu0 0
    %522 = vmatprep.mubr.bf16.mxu0 0
    %523 = vmatmul.mubr.bf16.gmra.mrb[0].mxu0 %v418
    %v524 = vpop.f32.mrb[0].mxu0
    %v525 = vadd.f32 %v440, %v524
    %v526 = vpop.f32.mrb[0].mxu0
    %v527 = vpop.f32.mrb[0].mxu0
    %v528 = vpop.f32.mrb[0].mxu0
    %529 = vdwg.mxu0
    %v530 = vtanh.pop %v525
    %v531 = vpack.c.bf16 %v530, %v530
    %v532 = vld [vmem:[#allocation12] sm:$0xf]
    %v533 = vld [vmem:[#allocation12 + $0x4] sm:$0xf]
    %v534 = vld [vmem:[#allocation12 + $0x8] sm:$0xf]
    %v535 = vld [vmem:[#allocation12 + $0xc] sm:$0xf]
    %v536 = vld [vmem:[#allocation12 + $0x10] sm:$0xf]
    %v537 = vld [vmem:[#allocation12 + $0x14] sm:$0xf]
    %v538 = vld [vmem:[#allocation12 + $0x18] sm:$0xf]
    %v539 = vld [vmem:[#allocation12 + $0x1c] sm:$0xf]
    %v540 = vld [vmem:[#allocation12 + $0x20] sm:$0xf]
    %v541 = vld [vmem:[#allocation12 + $0x24] sm:$0xf]
    %v542 = vld [vmem:[#allocation12 + $0x28] sm:$0xf]
    %v543 = vld [vmem:[#allocation12 + $0x2c] sm:$0xf]
    %v544 = vld [vmem:[#allocation12 + $0x30] sm:$0xf]
    %v545 = vld [vmem:[#allocation12 + $0x34] sm:$0xf]
    %v546 = vld [vmem:[#allocation12 + $0x38] sm:$0xf]
    %v547 = vld [vmem:[#allocation12 + $0x3c] sm:$0xf]
    %v548 = vld [vmem:[%s9] sm:$0x1]
    %v550 = vlaneseq
    %v551 = vshrl.u32 %v550, 7
    %v552 = vsub.s32 0, %v551
    %v553 = vrot.slane %v548, %v552
    %v571 = vunpack.c.l.b16 %v532
    %v572 = vunpack.c.l.b16 %v533
    %v573 = vunpack.c.l.b16 %v534
    %v574 = vunpack.c.l.b16 %v535
    %v575 = vunpack.c.l.b16 %v536
    %v576 = vunpack.c.l.b16 %v537
    %v577 = vunpack.c.l.b16 %v538
    %v578 = vunpack.c.l.b16 %v539
    %v579 = vunpack.c.l.b16 %v540
    %v580 = vunpack.c.l.b16 %v541
    %v581 = vunpack.c.l.b16 %v542
    %v582 = vunpack.c.l.b16 %v543
    %v583 = vunpack.c.l.b16 %v544
    %v584 = vunpack.c.l.b16 %v545
    %v585 = vunpack.c.l.b16 %v546
    %v586 = vunpack.c.l.b16 %v547
    %v587 = vpack.c.b16 %v572, %v571
    %v588 = vpack.c.b16 %v574, %v573
    %v589 = vpack.c.b16 %v576, %v575
    %v590 = vpack.c.b16 %v578, %v577
    %v591 = vpack.c.b16 %v580, %v579
    %v592 = vpack.c.b16 %v582, %v581
    %v593 = vpack.c.b16 %v584, %v583
    %v594 = vpack.c.b16 %v586, %v585
    %603 = vmatprep.subr.bf16.mxu0 0
    %604 = vmatpush1.bf16.msra.mxu0 %v587
    %605 = vmatprep.subr.bf16.mxu0 0
    %606 = vmatpush1.bf16.msra.mxu0 %v588
    %607 = vmatprep.subr.bf16.mxu0 0
    %608 = vmatpush1.bf16.msra.mxu0 %v589
    %609 = vmatprep.subr.bf16.mxu0 0
    %610 = vmatpush1.bf16.msra.mxu0 %v590
    %611 = vmatprep.subr.bf16.mxu0 0
    %612 = vmatpush1.bf16.msra.mxu0 %v591
    %613 = vmatprep.subr.bf16.mxu0 0
    %614 = vmatpush1.bf16.msra.mxu0 %v592
    %615 = vmatprep.subr.bf16.mxu0 0
    %616 = vmatpush1.bf16.msra.mxu0 %v593
    %617 = vmatprep.subr.bf16.mxu0 0
    %618 = vmatpush1.bf16.msra.mxu0 %v594
    %619 = vmatprep.subr.bf16.mxu0 0
    %620 = vmatpush1.bf16.msra.mxu0 0
    %621 = vmatprep.subr.bf16.mxu0 0
    %622 = vmatpush1.bf16.msra.mxu0 0
    %623 = vmatprep.subr.bf16.mxu0 0
    %624 = vmatpush1.bf16.msra.mxu0 0
    %625 = vmatprep.subr.bf16.mxu0 0
    %626 = vmatpush1.bf16.msra.mxu0 0
    %627 = vmatprep.subr.bf16.mxu0 0
    %628 = vmatpush1.bf16.msra.mxu0 0
    %629 = vmatprep.subr.bf16.mxu0 0
    %630 = vmatpush1.bf16.msra.mxu0 0
    %631 = vmatprep.subr.bf16.mxu0 0
    %632 = vmatpush1.bf16.msra.mxu0 0
    %633 = vmatprep.subr.bf16.mxu0 0
    %634 = vmatpush1.bf16.msra.mxu0 0
    %635 = vmatprep.mubr.bf16.mxu0 0
    %636 = vmatmul.mubr.bf16.gmra.mrb[0].mxu0 %v531
    %v637 = vpop.f32.mrb[0].mxu0
    %v638 = vadd.f32 %v553, %v637
    %v639 = vpop.f32.mrb[0].mxu0
    %v640 = vpop.f32.mrb[0].mxu0
    %v641 = vpop.f32.mrb[0].mxu0
    %642 = vdwg.mxu0
    %643 = vst [vmem:[#allocation15] sm:$0xff] %v638
    %v644 = vld [vmem:[#allocation2] sm:$0x1]
    %v645 = vmul.f32 %v644, 1.442695
    %v646 = vpow.pop %v645
    %v647 = vmax.f32 %v646, 0.0
    %v648 = vmin.f32 %v647, 100.0
    %vm649 = vcmask 0
    %650 = vst.msk [vmem:[#allocation17] sm:$0x1] %vm649, %v648
    // Predicated region
    $region70: #{tpu_custom_call.1} parent=1 // pred_check
      _
    $region71: #{tpu_custom_call.1} parent=1 // pred_check_branch
      %652 = sbr.rel (0) target = $region73
    $region72: #{tpu_custom_call.1} parent=1 // pred_region
      %s654 = ssub.s32 128, 128
      %655 = vsyncadd [#allocation5], %s654
      %s657 = sshll.u32 [#allocation14], 4
      %s658 = int_to_ptr.vmem [resolvable:$true] %s657
      %660 = dma.vmem_to_hbm [thread:$0]  %s658, 128, %s11, [#allocation5]
    $region73: #{tpu_custom_call.1} parent=1 // pred_fallthru
      _
    // Predicated region
    $region74: #{tpu_custom_call.1} parent=1 // pred_check
      _
    $region75: #{tpu_custom_call.1} parent=1 // pred_check_branch
      %662 = sbr.rel (0) target = $region77
    $region76: #{tpu_custom_call.1} parent=1 // pred_region
      %s664 = ssub.s32 128, 128
      %665 = vsyncadd [#allocation16], %s664
      %s667 = sshll.u32 [#allocation15], 4
      %s668 = int_to_ptr.vmem [resolvable:$true] %s667
      %670 = dma.vmem_to_hbm [thread:$0]  %s668, 128, %s12, [#allocation16]
    $region77: #{tpu_custom_call.1} parent=1 // pred_fallthru
      _
    // Predicated region
    $region78: #{tpu_custom_call.1} parent=1 // pred_check
      _
    $region79: #{tpu_custom_call.1} parent=1 // pred_check_branch
      %672 = sbr.rel (0) target = $region81
    $region80: #{tpu_custom_call.1} parent=1 // pred_region
      %s674 = ssub.s32 16, 16
      %675 = vsyncadd [#allocation16], %s674
      %s677 = sshll.u32 [#allocation17], 4
      %s678 = int_to_ptr.vmem [resolvable:$true] %s677
      %680 = dma.vmem_to_hbm [thread:$0]  %s678, 16, %s13, [#allocation16]
    $region81: #{tpu_custom_call.1} parent=1 // pred_fallthru
      _
    // Predicated region
    $region82: #{tpu_custom_call.1} parent=1 // pred_check
      _
    $region83: #{tpu_custom_call.1} parent=1 // pred_check_branch
      %682 = sbr.rel (0) target = $region85
    $region84: #{tpu_custom_call.1} parent=1 // pred_region
      %683 = dma.done [#allocation5], 128
    $region85: #{tpu_custom_call.1} parent=1 // pred_fallthru
      _
    // Predicated region
    $region86: #{tpu_custom_call.1} parent=1 // pred_check
      _
    $region87: #{tpu_custom_call.1} parent=1 // pred_check_branch
      %685 = sbr.rel (0) target = $region89
    $region88: #{tpu_custom_call.1} parent=1 // pred_region
      %686 = dma.done [#allocation16], 128
    $region89: #{tpu_custom_call.1} parent=1 // pred_fallthru
      _
    // Predicated region
    $region90: #{tpu_custom_call.1} parent=1 // pred_check
      _
    $region91: #{tpu_custom_call.1} parent=1 // pred_check_branch
      %688 = sbr.rel (0) target = $region93
    $region92: #{tpu_custom_call.1} parent=1 // pred_region
      %689 = dma.done [#allocation16], 16
    $region93: #{tpu_custom_call.1} parent=1 // pred_fallthru
      _
    %690 = vsyncpa [#allocation4], 1
    %691 = vsyncpa [#allocation7], 1
    %692 = vsyncpa [#allocation10], 1
    %693 = vsyncpa [#allocation13], 1
    %694 = vsyncpa [#allocation5], 1
    %695 = vsyncpa [#allocation16], 1

</llo_original>
